<compile_context>
chip_gen: v7x
topology: tpu7x:2x2x1
jax: 0.10.0
libtpu: 0.0.40
codegen_flags: <defaults>
</compile_context>

<pallas_src>
import jax
import jax.numpy as jnp
from jax.experimental import pallas as pl
from jax.experimental.pallas import tpu as pltpu

LANE = 128      # f32 lane width
SUBLANE = 8     # f32 sublane height


def _round_up(n, m):
    return ((n + m - 1) // m) * m


def qvalue_kernel(x_ref, w1_ref, b1_ref, w2_ref, b2_ref, o_ref):
    # fc1: bf16 operands, f32 accumulation on the MXU.
    h = jnp.dot(x_ref[...].astype(jnp.bfloat16), w1_ref[...],
                preferred_element_type=jnp.float32)
    # Bias + ReLU in f32 on the VPU (cast only at the matmul boundary).
    h = jnp.maximum(h + b1_ref[...], 0.0)                # (TB, Hp) + (1, Hp)
    # fc2: explicit bf16 cast of activations for the second MXU pass.
    y = jnp.dot(h.astype(jnp.bfloat16), w2_ref[...],
                preferred_element_type=jnp.float32)
    o_ref[...] = (y + b2_ref[...]).astype(o_ref.dtype)    # lane-dense (TB, Ap) store


def qvalue_forward(x, w1, b1, w2, b2, *, action_dim, block_b=128):
    """Fused QValueNet forward.

    x : (B, S)   f32
    w1: (S, Hp)  bf16   b1: (1, Hp) f32   (Hp = hidden padded to 128 lanes)
    w2: (Hp, Ap) bf16   b2: (1, Ap) f32   (Ap = action padded to 128 lanes)
    Returns (B, action_dim) f32.
    """
    B, S = x.shape
    Hp = w1.shape[1]
    Ap = w2.shape[1]

    # Batch tile: multiple of 8 sublanes, capped at block_b rows per grid step.
    tb = min(block_b, _round_up(max(B, 1), SUBLANE))
    b_pad = _round_up(B, tb)
    if b_pad != B:
        x = jnp.pad(x, ((0, b_pad - B), (0, 0)))

    grid = (b_pad // tb,)

    flops = 2 * b_pad * (S * Hp + Hp * Ap)
    bytes_accessed = (
        x.size * x.dtype.itemsize
        + w1.size * w1.dtype.itemsize + b1.size * b1.dtype.itemsize
        + w2.size * w2.dtype.itemsize + b2.size * b2.dtype.itemsize
        + b_pad * Ap * x.dtype.itemsize)

    out = pl.pallas_call(
        qvalue_kernel,
        out_shape=jax.ShapeDtypeStruct((b_pad, Ap), x.dtype),
        grid=grid,
        in_specs=[
            # Activations: tiled over batch, double-buffered by the pipeline.
            pl.BlockSpec((tb, S), lambda i: (i, 0)),
            # Weights / biases: constant index_map -> VMEM-resident across steps.
            pl.BlockSpec((S, Hp), lambda i: (0, 0)),
            pl.BlockSpec((1, Hp), lambda i: (0, 0)),
            pl.BlockSpec((Hp, Ap), lambda i: (0, 0)),
            pl.BlockSpec((1, Ap), lambda i: (0, 0)),
        ],
        # Lane-dense output slab (last dim = Ap, a multiple of 128).
        out_specs=pl.BlockSpec((tb, Ap), lambda i: (i, 0)),
        compiler_params=pltpu.CompilerParams(
            dimension_semantics=("parallel",)),   # shard batch steps across TCs
        cost_estimate=pl.CostEstimate(
            flops=flops, transcendentals=0, bytes_accessed=bytes_accessed),
    )(x, w1, b1, w2, b2)

    # Strip batch / lane padding (free layout plumbing outside the kernel).
    return out[:B, :action_dim]


def init_qvalue_params(key, state_dim, hidden_dim, action_dim, dtype=jnp.float32):
    """nn.Linear default init U(-1/sqrt(in), 1/sqrt(in)); weights kept (in, out)."""
    k1, k2, k3, k4 = jax.random.split(key, 4)
    bound1 = state_dim ** -0.5
    bound2 = hidden_dim ** -0.5
    w1 = jax.random.uniform(k1, (state_dim, hidden_dim), dtype, -bound1, bound1)
    b1 = jax.random.uniform(k2, (hidden_dim,), dtype, -bound1, bound1)
    w2 = jax.random.uniform(k3, (hidden_dim, action_dim), dtype, -bound2, bound2)
    b2 = jax.random.uniform(k4, (action_dim,), dtype, -bound2, bound2)
    return w1, b1, w2, b2


def pack_qvalue_params(w1, b1, w2, b2, *, matmul_dtype=jnp.bfloat16):
    """Zero-pad hidden/action dims to 128 lanes; cast weights to the MXU dtype.

    Zero padding is exact: padded hidden columns give relu(0 + 0) = 0, padded
    w2 rows contribute 0, and padded output columns are sliced off."""
    S, H = w1.shape
    A = w2.shape[1]
    Hp = _round_up(H, LANE)
    Ap = _round_up(A, LANE)
    w1p = jnp.zeros((S, Hp), matmul_dtype).at[:, :H].set(w1.astype(matmul_dtype))
    b1p = jnp.zeros((1, Hp), jnp.float32).at[:, :H].set(b1.astype(jnp.float32))
    w2p = jnp.zeros((Hp, Ap), matmul_dtype).at[:H, :A].set(w2.astype(matmul_dtype))
    b2p = jnp.zeros((1, Ap), jnp.float32).at[:, :A].set(b2.astype(jnp.float32))
    return w1p, b1p, w2p, b2p


def qvalue_reference(x, w1, b1, w2, b2):
    h = jnp.maximum(x @ w1 + b1, 0.0)
    return h @ w2 + b2


if __name__ == "__main__":
    state_dim, hidden_dim, action_dim = 16, 32, 8

    key = jax.random.PRNGKey(0)
    kx, kp, kx2 = jax.random.split(key, 3)
    w1, b1, w2, b2 = init_qvalue_params(kp, state_dim, hidden_dim, action_dim)
    w1p, b1p, w2p, b2p = pack_qvalue_params(w1, b1, w2, b2)

    # Small-batch check (exercises batch padding to one 8-row tile).
    batch = 2
    x = jax.random.normal(kx, (batch, state_dim), jnp.float32)
    out = qvalue_forward(x, w1p, b1p, w2p, b2p, action_dim=action_dim)
    out = jax.block_until_ready(out)
    ref = qvalue_reference(x, w1, b1, w2, b2)
    assert out.shape == (batch, action_dim), out.shape
    # bf16 matmul inputs with f32 accumulation -> loosened tolerance vs f32 ref.
    max_err = float(jnp.max(jnp.abs(out - ref)))
    assert jnp.allclose(out, ref, atol=3e-2, rtol=3e-2), f"mismatch: {max_err}"

    # Multi-tile check (exercises the grid loop + non-multiple-of-tile batch).
    batch2 = 200
    x2 = jax.random.normal(kx2, (batch2, state_dim), jnp.float32)
    out2 = qvalue_forward(x2, w1p, b1p, w2p, b2p, action_dim=action_dim)
    out2 = jax.block_until_ready(out2)
    ref2 = qvalue_reference(x2, w1, b1, w2, b2)
    assert out2.shape == (batch2, action_dim), out2.shape
    max_err2 = float(jnp.max(jnp.abs(out2 - ref2)))
    assert jnp.allclose(out2, ref2, atol=3e-2, rtol=3e-2), f"mismatch: {max_err2}"

    print("KERNEL_OK")
</pallas_src>

<mosaic_0001>
module attributes {stable_mosaic.version = 11 : i64} {
  func.func @qvalue_kernel(%arg0: i32, %arg1: memref<8x16xf32, #tpu.memory_space<vmem>>, %arg2: memref<16x128xbf16, #tpu.memory_space<vmem>>, %arg3: memref<1x128xf32, #tpu.memory_space<vmem>>, %arg4: memref<128x128xbf16, #tpu.memory_space<vmem>>, %arg5: memref<1x128xf32, #tpu.memory_space<vmem>>, %arg6: memref<8x128xf32, #tpu.memory_space<vmem>>) attributes {dimension_semantics = [#tpu.dimension_semantics<parallel>], iteration_bounds = array<i64: 1>, scalar_prefetch = 0 : i64, scratch_operands = 0 : i64, tpu.core_type = #tpu.core_type<tc>, window_params = [{transform_indices = @transform_0, window_bounds = array<i64: 8, 16>}, {pipeline_mode = #tpu.pipeline_mode<synchronous>, transform_indices = @transform_1, window_bounds = array<i64: 16, 128>}, {pipeline_mode = #tpu.pipeline_mode<synchronous>, transform_indices = @transform_2, window_bounds = array<i64: 1, 128>}, {pipeline_mode = #tpu.pipeline_mode<synchronous>, transform_indices = @transform_3, window_bounds = array<i64: 128, 128>}, {pipeline_mode = #tpu.pipeline_mode<synchronous>, transform_indices = @transform_4, window_bounds = array<i64: 1, 128>}, {transform_indices = @transform_5, window_bounds = array<i64: 8, 128>}]} {
    %c0 = arith.constant 0 : index
    %c0_0 = arith.constant 0 : index
    %0 = vector.load %arg1[%c0, %c0_0] : memref<8x16xf32, #tpu.memory_space<vmem>>, vector<8x16xf32>
    %1 = arith.truncf %0 : vector<8x16xf32> to vector<8x16xbf16>
    %c0_1 = arith.constant 0 : index
    %c0_2 = arith.constant 0 : index
    %2 = vector.load %arg2[%c0_1, %c0_2] : memref<16x128xbf16, #tpu.memory_space<vmem>>, vector<16x128xbf16>
    %cst = arith.constant dense<0.000000e+00> : vector<8x128xf32>
    %3 = tpu.matmul %1, %2, %cst {dimension_numbers = #tpu.dot_dimension_numbers<[1], [0], [0], [1], [0, 0, 1, 1], [], []>} : vector<8x16xbf16>, vector<16x128xbf16>, vector<8x128xf32> -> vector<8x128xf32>
    %c0_3 = arith.constant 0 : index
    %c0_4 = arith.constant 0 : index
    %4 = vector.load %arg3[%c0_3, %c0_4] : memref<1x128xf32, #tpu.memory_space<vmem>>, vector<1x128xf32>
    %5 = vector.broadcast %4 : vector<1x128xf32> to vector<8x128xf32>
    %6 = arith.addf %3, %5 : vector<8x128xf32>
    %cst_5 = arith.constant 0.000000e+00 : f32
    %7 = vector.broadcast %cst_5 : f32 to vector<8x128xf32>
    %8 = arith.maximumf %6, %7 : vector<8x128xf32>
    %9 = arith.truncf %8 : vector<8x128xf32> to vector<8x128xbf16>
    %c0_6 = arith.constant 0 : index
    %c0_7 = arith.constant 0 : index
    %10 = vector.load %arg4[%c0_6, %c0_7] : memref<128x128xbf16, #tpu.memory_space<vmem>>, vector<128x128xbf16>
    %cst_8 = arith.constant dense<0.000000e+00> : vector<8x128xf32>
    %11 = tpu.matmul %9, %10, %cst_8 {dimension_numbers = #tpu.dot_dimension_numbers<[1], [0], [0], [1], [0, 0, 1, 1], [], []>} : vector<8x128xbf16>, vector<128x128xbf16>, vector<8x128xf32> -> vector<8x128xf32>
    %c0_9 = arith.constant 0 : index
    %c0_10 = arith.constant 0 : index
    %12 = vector.load %arg5[%c0_9, %c0_10] : memref<1x128xf32, #tpu.memory_space<vmem>>, vector<1x128xf32>
    %13 = vector.broadcast %12 : vector<1x128xf32> to vector<8x128xf32>
    %14 = arith.addf %11, %13 : vector<8x128xf32>
    %c0_11 = arith.constant 0 : index
    %c0_12 = arith.constant 0 : index
    %15 = vector.load %arg6[%c0_11, %c0_12] : memref<8x128xf32, #tpu.memory_space<vmem>>, vector<8x128xf32>
    tpu.vector_store %arg6[%c0_11, %c0_12], %14 {strides = array<i32>} : memref<8x128xf32, #tpu.memory_space<vmem>>, vector<8x128xf32>,
    return
  }
  func.func @transform_0(%arg0: i32) -> (i32, i32) {
    %c0_i32 = arith.constant 0 : i32
    %c0_i32_0 = arith.constant 0 : i32
    return %arg0, %c0_i32 : i32, i32
  }
  func.func @transform_1(%arg0: i32) -> (i32, i32) {
    %c0_i32 = arith.constant 0 : i32
    %c0_i32_0 = arith.constant 0 : i32
    %c0_i32_1 = arith.constant 0 : i32
    return %c0_i32, %c0_i32_0 : i32, i32
  }
  func.func @transform_2(%arg0: i32) -> (i32, i32) {
    %c0_i32 = arith.constant 0 : i32
    %c0_i32_0 = arith.constant 0 : i32
    %c0_i32_1 = arith.constant 0 : i32
    return %c0_i32, %c0_i32_0 : i32, i32
  }
  func.func @transform_3(%arg0: i32) -> (i32, i32) {
    %c0_i32 = arith.constant 0 : i32
    %c0_i32_0 = arith.constant 0 : i32
    %c0_i32_1 = arith.constant 0 : i32
    return %c0_i32, %c0_i32_0 : i32, i32
  }
  func.func @transform_4(%arg0: i32) -> (i32, i32) {
    %c0_i32 = arith.constant 0 : i32
    %c0_i32_0 = arith.constant 0 : i32
    %c0_i32_1 = arith.constant 0 : i32
    return %c0_i32, %c0_i32_0 : i32, i32
  }
  func.func @transform_5(%arg0: i32) -> (i32, i32) {
    %c0_i32 = arith.constant 0 : i32
    %c0_i32_0 = arith.constant 0 : i32
    return %arg0, %c0_i32 : i32, i32
  }
}

</mosaic_0001>

<llo_original>
// kernel: tpu_custom_call.1
$region0: #{tpu_custom_call.1}
  #allocation0 [shape = 'u32[]', space=smem, size = 0x4, offset = 0x4, fixed_abs, tag = 'smem constant byte address 0x4 - core index']
  #allocation1 [shape = 'u32[144,128]{1,0:T(1,128)}', space=vmem, size = 0x12000, scoped, tag = 'internal scratch']
  %s0 = inlined_call_operand.hbm [shape: f32[8,16], index: 0, kind: input, shape index: {}]
  %s1 = inlined_call_operand.hbm [shape: bf16[16,128], index: 1, kind: input, shape index: {}]
  %s2 = inlined_call_operand.vmem [shape: f32[1,128], index: 2, kind: input, shape index: {}]
  %s3 = inlined_call_operand.hbm [shape: bf16[128,128], index: 3, kind: input, shape index: {}]
  %s4 = inlined_call_operand.vmem [shape: f32[1,128], index: 4, kind: input, shape index: {}]
  %s5 = inlined_call_operand.hbm [shape: f32[8,128], index: 5, kind: output, shape index: {}]
  %s6 = sld [smem:[#allocation0]]
  $region42: #{tpu_custom_call.1} parent=0
    _
  %s8 = ssub.s32 1, %s6
  %s9 = scalar_select 0, %s8, %s6
  $region1: #{tpu_custom_call.1} parent=0
    #allocation2 [shape = 'u8[4096]{0}', space=vmem, size = 0x1000, scoped, tag = 'input window, operand 0, single buffered']
    #allocation3 [shape = 's32[1]{0}', space=sflag, size = 0x4, scoped, tag = 'scoped memory for tpu_custom_call.1']
    #allocation4 [shape = 's32[1]{0}', space=sflag, size = 0x4, scoped, tag = 'scoped memory for tpu_custom_call.1']
    #allocation5 [shape = 'u8[4096]{0}', space=vmem, size = 0x1000, scoped, tag = 'input window, operand 1, single buffered']
    #allocation6 [shape = 's32[1]{0}', space=sflag, size = 0x4, scoped, tag = 'scoped memory for tpu_custom_call.1']
    #allocation7 [shape = 'u8[32768]{0}', space=vmem, size = 0x8000, scoped, tag = 'input window, operand 3, single buffered']
    #allocation8 [shape = 'u8[4096]{0}', space=vmem, size = 0x1000, scoped, tag = 'output window, operand 0, single buffered']
    %10 = vsyncpa [#allocation3], 0
    %11 = vsyncpa [#allocation6], 0
    %12 = vsyncpa [#allocation4], 0
    // Predicated region
    $region2: #{tpu_custom_call.1} parent=1 // pred_check
      _
    $region3: #{tpu_custom_call.1} parent=1 // pred_check_branch
      %14 = sbr.rel (0) target = $region5
    $region4: #{tpu_custom_call.1} parent=1 // pred_region
      %s16 = ssub.s32 128, 128
      %17 = vsyncadd [#allocation3], %s16
      %s19 = sshll.u32 [#allocation2], 4
      %s20 = int_to_ptr.vmem [resolvable:$true] %s19
      %22 = dma.hbm_to_vmem [thread:$0]  %s0, 128, %s20, [#allocation3]
    $region5: #{tpu_custom_call.1} parent=1 // pred_fallthru
      _
    // Predicated region
    $region6: #{tpu_custom_call.1} parent=1 // pred_check
      _
    $region7: #{tpu_custom_call.1} parent=1 // pred_check_branch
      %24 = sbr.rel (0) target = $region9
    $region8: #{tpu_custom_call.1} parent=1 // pred_region
      %s26 = ssub.s32 128, 128
      %27 = vsyncadd [#allocation6], %s26
      %s28 = sshll.u32 [#allocation5], 4
      %s29 = int_to_ptr.vmem [resolvable:$true] %s28
      %34 = dma.hbm_to_vmem [thread:$0]  %s1, 128, %s29, [#allocation6], 64, 64, 4
    $region9: #{tpu_custom_call.1} parent=1 // pred_fallthru
      _
    // Predicated region
    $region10: #{tpu_custom_call.1} parent=1 // pred_check
      _
    $region11: #{tpu_custom_call.1} parent=1 // pred_check_branch
      %36 = sbr.rel (0) target = $region13
    $region12: #{tpu_custom_call.1} parent=1 // pred_region
      _
    $region13: #{tpu_custom_call.1} parent=1 // pred_fallthru
      _
    // Predicated region
    $region14: #{tpu_custom_call.1} parent=1 // pred_check
      _
    $region15: #{tpu_custom_call.1} parent=1 // pred_check_branch
      %38 = sbr.rel (0) target = $region17
    $region16: #{tpu_custom_call.1} parent=1 // pred_region
      %s40 = ssub.s32 1024, 1024
      %41 = vsyncadd [#allocation6], %s40
      %s42 = sshll.u32 [#allocation7], 4
      %s43 = int_to_ptr.vmem [resolvable:$true] %s42
      %48 = dma.hbm_to_vmem [thread:$0]  %s3, 1024, %s43, [#allocation6], 64, 64, 4
    $region17: #{tpu_custom_call.1} parent=1 // pred_fallthru
      _
    // Predicated region
    $region18: #{tpu_custom_call.1} parent=1 // pred_check
      _
    $region19: #{tpu_custom_call.1} parent=1 // pred_check_branch
      %50 = sbr.rel (0) target = $region21
    $region20: #{tpu_custom_call.1} parent=1 // pred_region
      _
    $region21: #{tpu_custom_call.1} parent=1 // pred_fallthru
      _
    // Predicated region
    $region22: #{tpu_custom_call.1} parent=1 // pred_check
      _
    $region23: #{tpu_custom_call.1} parent=1 // pred_check_branch
      %52 = sbr.rel (0) target = $region25
    $region24: #{tpu_custom_call.1} parent=1 // pred_region
      %53 = dma.done [#allocation3], 128
    $region25: #{tpu_custom_call.1} parent=1 // pred_fallthru
      _
    // Predicated region
    $region26: #{tpu_custom_call.1} parent=1 // pred_check
      _
    $region27: #{tpu_custom_call.1} parent=1 // pred_check_branch
      %55 = sbr.rel (0) target = $region29
    $region28: #{tpu_custom_call.1} parent=1 // pred_region
      %56 = dma.done [#allocation6], 128
    $region29: #{tpu_custom_call.1} parent=1 // pred_fallthru
      _
    // Predicated region
    $region30: #{tpu_custom_call.1} parent=1 // pred_check
      _
    $region31: #{tpu_custom_call.1} parent=1 // pred_check_branch
      %58 = sbr.rel (0) target = $region33
    $region32: #{tpu_custom_call.1} parent=1 // pred_region
      %59 = dma.done [#allocation6], 1024
    $region33: #{tpu_custom_call.1} parent=1 // pred_fallthru
      _
    %v61 = vld [vmem:[#allocation2] sm:$0xff]
    %v62 = vpack.c.bf16 %v61, %v61
    %v63 = vld [vmem:[#allocation5] sm:$0xf]
    %v64 = vld [vmem:[#allocation5 + $0x4] sm:$0xf]
    %v65 = vld [vmem:[%s2] sm:$0x1]
    %v67 = vlaneseq
    %v68 = vshrl.u32 %v67, 7
    %v69 = vsub.s32 0, %v68
    %v70 = vrot.slane %v65, %v69
    %v74 = vunpack.c.l.b16 %v63
    %v75 = vunpack.c.l.b16 %v64
    %v76 = vpack.c.b16 %v75, %v74
    %vm78 = vcmask 130048
    %v80 = vsel %vm78, %v62, 0
    %82 = vmatprep.subr.bf16.mxu0 0
    %83 = vmatpush1.bf16.msra.mxu0 %v76
    %84 = vmatprep.subr.bf16.mxu0 0
    %85 = vmatpush1.bf16.msra.mxu0 0
    %86 = vmatprep.subr.bf16.mxu0 0
    %87 = vmatpush1.bf16.msra.mxu0 0
    %88 = vmatprep.subr.bf16.mxu0 0
    %89 = vmatpush1.bf16.msra.mxu0 0
    %90 = vmatprep.subr.bf16.mxu0 0
    %91 = vmatpush1.bf16.msra.mxu0 0
    %92 = vmatprep.subr.bf16.mxu0 0
    %93 = vmatpush1.bf16.msra.mxu0 0
    %94 = vmatprep.subr.bf16.mxu0 0
    %95 = vmatpush1.bf16.msra.mxu0 0
    %96 = vmatprep.subr.bf16.mxu0 0
    %97 = vmatpush1.bf16.msra.mxu0 0
    %98 = vmatprep.subr.bf16.mxu0 0
    %99 = vmatpush1.bf16.msra.mxu0 0
    %100 = vmatprep.subr.bf16.mxu0 0
    %101 = vmatpush1.bf16.msra.mxu0 0
    %102 = vmatprep.subr.bf16.mxu0 0
    %103 = vmatpush1.bf16.msra.mxu0 0
    %104 = vmatprep.subr.bf16.mxu0 0
    %105 = vmatpush1.bf16.msra.mxu0 0
    %106 = vmatprep.subr.bf16.mxu0 0
    %107 = vmatpush1.bf16.msra.mxu0 0
    %108 = vmatprep.subr.bf16.mxu0 0
    %109 = vmatpush1.bf16.msra.mxu0 0
    %110 = vmatprep.subr.bf16.mxu0 0
    %111 = vmatpush1.bf16.msra.mxu0 0
    %112 = vmatprep.subr.bf16.mxu0 0
    %113 = vmatpush1.bf16.msra.mxu0 0
    %114 = vmatprep.mubr.bf16.mxu0 0
    %115 = vmatmul.mubr.bf16.gmra.mrb[0].mxu0 %v80
    %v116 = vpop.f32.mrb[0].mxu0
    %v117 = vadd.f32 %v70, %v116
    %v118 = vpop.f32.mrb[0].mxu0
    %v119 = vpop.f32.mrb[0].mxu0
    %v120 = vpop.f32.mrb[0].mxu0
    %121 = vdwg.mxu0
    %v122 = vmax.f32 %v117, 0.0
    %v123 = vpack.c.bf16 %v122, %v122
    %v124 = vld [vmem:[#allocation7] sm:$0xf]
    %v125 = vld [vmem:[#allocation7 + $0x4] sm:$0xf]
    %v126 = vld [vmem:[#allocation7 + $0x8] sm:$0xf]
    %v127 = vld [vmem:[#allocation7 + $0xc] sm:$0xf]
    %v128 = vld [vmem:[#allocation7 + $0x10] sm:$0xf]
    %v129 = vld [vmem:[#allocation7 + $0x14] sm:$0xf]
    %v130 = vld [vmem:[#allocation7 + $0x18] sm:$0xf]
    %v131 = vld [vmem:[#allocation7 + $0x1c] sm:$0xf]
    %v132 = vld [vmem:[#allocation7 + $0x20] sm:$0xf]
    %v133 = vld [vmem:[#allocation7 + $0x24] sm:$0xf]
    %v134 = vld [vmem:[#allocation7 + $0x28] sm:$0xf]
    %v135 = vld [vmem:[#allocation7 + $0x2c] sm:$0xf]
    %v136 = vld [vmem:[#allocation7 + $0x30] sm:$0xf]
    %v137 = vld [vmem:[#allocation7 + $0x34] sm:$0xf]
    %v138 = vld [vmem:[#allocation7 + $0x38] sm:$0xf]
    %v139 = vld [vmem:[#allocation7 + $0x3c] sm:$0xf]
    %v140 = vld [vmem:[%s4] sm:$0x1]
    %v142 = vlaneseq
    %v143 = vshrl.u32 %v142, 7
    %v144 = vsub.s32 0, %v143
    %v145 = vrot.slane %v140, %v144
    %v163 = vunpack.c.l.b16 %v124
    %v164 = vunpack.c.l.b16 %v125
    %v165 = vunpack.c.l.b16 %v126
    %v166 = vunpack.c.l.b16 %v127
    %v167 = vunpack.c.l.b16 %v128
    %v168 = vunpack.c.l.b16 %v129
    %v169 = vunpack.c.l.b16 %v130
    %v170 = vunpack.c.l.b16 %v131
    %v171 = vunpack.c.l.b16 %v132
    %v172 = vunpack.c.l.b16 %v133
    %v173 = vunpack.c.l.b16 %v134
    %v174 = vunpack.c.l.b16 %v135
    %v175 = vunpack.c.l.b16 %v136
    %v176 = vunpack.c.l.b16 %v137
    %v177 = vunpack.c.l.b16 %v138
    %v178 = vunpack.c.l.b16 %v139
    %v179 = vpack.c.b16 %v164, %v163
    %v180 = vpack.c.b16 %v166, %v165
    %v181 = vpack.c.b16 %v168, %v167
    %v182 = vpack.c.b16 %v170, %v169
    %v183 = vpack.c.b16 %v172, %v171
    %v184 = vpack.c.b16 %v174, %v173
    %v185 = vpack.c.b16 %v176, %v175
    %v186 = vpack.c.b16 %v178, %v177
    %195 = vmatprep.subr.bf16.mxu0 0
    %196 = vmatpush1.bf16.msra.mxu0 %v179
    %197 = vmatprep.subr.bf16.mxu0 0
    %198 = vmatpush1.bf16.msra.mxu0 %v180
    %199 = vmatprep.subr.bf16.mxu0 0
    %200 = vmatpush1.bf16.msra.mxu0 %v181
    %201 = vmatprep.subr.bf16.mxu0 0
    %202 = vmatpush1.bf16.msra.mxu0 %v182
    %203 = vmatprep.subr.bf16.mxu0 0
    %204 = vmatpush1.bf16.msra.mxu0 %v183
    %205 = vmatprep.subr.bf16.mxu0 0
    %206 = vmatpush1.bf16.msra.mxu0 %v184
    %207 = vmatprep.subr.bf16.mxu0 0
    %208 = vmatpush1.bf16.msra.mxu0 %v185
    %209 = vmatprep.subr.bf16.mxu0 0
    %210 = vmatpush1.bf16.msra.mxu0 %v186
    %211 = vmatprep.subr.bf16.mxu0 0
    %212 = vmatpush1.bf16.msra.mxu0 0
    %213 = vmatprep.subr.bf16.mxu0 0
    %214 = vmatpush1.bf16.msra.mxu0 0
    %215 = vmatprep.subr.bf16.mxu0 0
    %216 = vmatpush1.bf16.msra.mxu0 0
    %217 = vmatprep.subr.bf16.mxu0 0
    %218 = vmatpush1.bf16.msra.mxu0 0
    %219 = vmatprep.subr.bf16.mxu0 0
    %220 = vmatpush1.bf16.msra.mxu0 0
    %221 = vmatprep.subr.bf16.mxu0 0
    %222 = vmatpush1.bf16.msra.mxu0 0
    %223 = vmatprep.subr.bf16.mxu0 0
    %224 = vmatpush1.bf16.msra.mxu0 0
    %225 = vmatprep.subr.bf16.mxu0 0
    %226 = vmatpush1.bf16.msra.mxu0 0
    %227 = vmatprep.mubr.bf16.mxu0 0
    %228 = vmatmul.mubr.bf16.gmra.mrb[0].mxu0 %v123
    %v229 = vpop.f32.mrb[0].mxu0
    %v230 = vadd.f32 %v145, %v229
    %v231 = vpop.f32.mrb[0].mxu0
    %v232 = vpop.f32.mrb[0].mxu0
    %v233 = vpop.f32.mrb[0].mxu0
    %234 = vdwg.mxu0
    %235 = vst [vmem:[#allocation8] sm:$0xff] %v230
    // Predicated region
    $region34: #{tpu_custom_call.1} parent=1 // pred_check
      _
    $region35: #{tpu_custom_call.1} parent=1 // pred_check_branch
      %237 = sbr.rel (0) target = $region37
    $region36: #{tpu_custom_call.1} parent=1 // pred_region
      %s239 = ssub.s32 128, 128
      %240 = vsyncadd [#allocation4], %s239
      %s242 = sshll.u32 [#allocation8], 4
      %s243 = int_to_ptr.vmem [resolvable:$true] %s242
      %245 = dma.vmem_to_hbm [thread:$0]  %s243, 128, %s5, [#allocation4]
    $region37: #{tpu_custom_call.1} parent=1 // pred_fallthru
      _
    // Predicated region
    $region38: #{tpu_custom_call.1} parent=1 // pred_check
      _
    $region39: #{tpu_custom_call.1} parent=1 // pred_check_branch
      %247 = sbr.rel (0) target = $region41
    $region40: #{tpu_custom_call.1} parent=1 // pred_region
      %248 = dma.done [#allocation4], 128
    $region41: #{tpu_custom_call.1} parent=1 // pred_fallthru
      _
    %249 = vsyncpa [#allocation3], 1
    %250 = vsyncpa [#allocation6], 1
    %251 = vsyncpa [#allocation4], 1

</llo_original>
